<compile_context>
chip_gen: v6e
topology: v6e:2x2x1
jax: 0.10.0
libtpu: 0.0.40
codegen_flags: <defaults>
</compile_context>

<pallas_src>
import functools

import jax
import jax.numpy as jnp
from jax import lax
from jax.experimental import pallas as pl
from jax.experimental.pallas import tpu as pltpu


def _se_attention_kernel(x_ref, w1_ref, w2_ref, o_ref, *, inv_hw):
    # x_ref / o_ref: (Bt, C, HW); w1_ref: (Cr, C); w2_ref: (C, Cr).

    # Squeeze: global average pool over the spatial (lane) axis, f32 accumulation.
    pooled = jnp.sum(x_ref[...].astype(jnp.float32), axis=-1) * inv_hw        # (Bt, C)

    # Excitation: two tiny matmuls (far below one MXU pass; hidden under DMA).
    # dot_general contracts against the weight's second axis (== Linear's W^T).
    h = lax.dot_general(pooled, w1_ref[...].astype(jnp.float32),
                        (((1,), (1,)), ((), ())),
                        preferred_element_type=jnp.float32)                    # (Bt, Cr)
    h = jnp.maximum(h, 0.0)
    s = lax.dot_general(h, w2_ref[...].astype(jnp.float32),
                        (((1,), (1,)), ((), ())),
                        preferred_element_type=jnp.float32)                    # (Bt, C)
    s = jax.nn.sigmoid(s)

    # Scale: re-read x from VMEM where it is used (loads are cheap; avoids
    # keeping the whole tile live across the matmuls), multiply in f32 and
    # cast only the final result.
    o_ref[...] = (x_ref[...].astype(jnp.float32) * s[:, :, None]).astype(o_ref.dtype)


def _vmem_capacity_bytes():
    try:
        return int(pltpu.get_tpu_info().vmem_capacity_bytes)
    except Exception:
        return 64 << 20            # conservative fallback (v7x-sized VMEM)


def _device_kind():
    try:
        return jax.devices()[0].device_kind.lower()
    except Exception:
        return ""


def _choose_batch_tile(B, C, HW, itemsize, budget_bytes, min_steps):
    """Largest Bt whose double-buffered in+out blocks fit the VMEM budget.
    Independent of B's divisors (a ragged last block is fine: per-image work is
    independent and out-of-bounds stores are masked)."""
    per_image = 2 * 2 * C * HW * itemsize          # double-buffered input + output
    bt = max(1, int(budget_bytes // per_image))
    bt = min(bt, B)
    if min_steps > 1:
        bt = min(bt, max(1, B // min_steps))       # keep >= min_steps grid steps
    return bt


def se_attention(x, w1, w2):
    """x: (B, C, H, W); w1: (C//r, C); w2: (C, C//r). Returns (B, C, H, W)."""
    B, C, H, W = x.shape
    Cr = w1.shape[0]
    HW = H * W
    itemsize = jnp.dtype(x.dtype).itemsize

    # Per-generation VMEM tuning: large tiles on 128 MiB parts (v5e/v6e),
    # capped on v7x's 64 MiB.
    vmem_cap = _vmem_capacity_bytes()
    if vmem_cap >= (100 << 20):
        budget_bytes, vmem_limit = 64 << 20, 96 << 20
    else:
        budget_bytes, vmem_limit = 40 << 20, 48 << 20

    # On v7x, shard the batch grid across both TensorCores (keep >= 2 steps);
    # single-TC chips get a plain "parallel" axis (extra steps are pure overhead).
    if "v7" in _device_kind() and hasattr(pltpu, "CORE_PARALLEL"):
        dim_sem = (pltpu.CORE_PARALLEL,)
        min_steps = 2
    else:
        dim_sem = ("parallel",)
        min_steps = 1

    Bt = _choose_batch_tile(B, C, HW, itemsize, budget_bytes, min_steps)
    grid = pl.cdiv(B, Bt)

    kernel = functools.partial(_se_attention_kernel, inv_hw=1.0 / HW)

    # Advisory cost hint for XLA's scheduler: the op is HBM-bound (read + write x).
    cost = pl.CostEstimate(
        flops=3 * B * C * HW + 4 * B * C * Cr,          # pool-sum + scale + excitation
        transcendentals=B * C,                          # sigmoid
        bytes_accessed=2 * B * C * HW * itemsize
                       + 2 * C * Cr * jnp.dtype(w1.dtype).itemsize,
    )

    out_flat = pl.pallas_call(
        kernel,
        out_shape=jax.ShapeDtypeStruct((B, C, HW), x.dtype),
        grid_spec=pltpu.PrefetchScalarGridSpec(
            num_scalar_prefetch=0,
            grid=(grid,),
            in_specs=[
                pl.BlockSpec((Bt, C, HW), lambda b: (b, 0, 0)),
                pl.BlockSpec((Cr, C), lambda b: (0, 0)),
                pl.BlockSpec((C, Cr), lambda b: (0, 0)),
            ],
            out_specs=pl.BlockSpec((Bt, C, HW), lambda b: (b, 0, 0)),
        ),
        compiler_params=pltpu.CompilerParams(
            dimension_semantics=dim_sem,
            vmem_limit_bytes=vmem_limit,
        ),
        cost_estimate=cost,
    )(x.reshape(B, C, HW), w1, w2)

    return out_flat.reshape(B, C, H, W)


def se_attention_ref(x, w1, w2):
    """Pure-JAX reference matching the PyTorch module."""
    y = jnp.mean(x, axis=(2, 3))                 # (B, C)
    y = jnp.maximum(y @ w1.T, 0.0)               # (B, C//r)
    y = jax.nn.sigmoid(y @ w2.T)                 # (B, C)
    return x * y[:, :, None, None]


if __name__ == "__main__":
    reduction = 16

    def run_case(B, C, H, W):
        Cr = C // reduction
        key = jax.random.PRNGKey(0)
        kx, k1, k2 = jax.random.split(key, 3)
        x = jax.random.normal(kx, (B, C, H, W), dtype=jnp.float32)
        # Same shapes as nn.Linear(C, C//r) / nn.Linear(C//r, C) weights (no bias).
        w1 = jax.random.normal(k1, (Cr, C), dtype=jnp.float32) * 0.1
        w2 = jax.random.normal(k2, (C, Cr), dtype=jnp.float32) * 0.1

        out = jax.block_until_ready(se_attention(x, w1, w2))
        ref = se_attention_ref(x, w1, w2)
        assert out.shape == (B, C, H, W)
        assert jnp.allclose(out, ref, atol=1e-5, rtol=1e-5), "mismatch vs reference"

    run_case(2, 64, 16, 16)   # HW = 256: lane-aligned spatial
    run_case(2, 64, 14, 14)   # HW = 196: unpadded path with masked tail store
    run_case(4, 64, 9, 7)     # HW = 63 : small odd spatial, larger batch

    print("KERNEL_OK")
</pallas_src>

<mosaic_0001>
module attributes {stable_mosaic.version = 11 : i64} {
  func.func @_se_attention_kernel(%arg0: i32, %arg1: memref<2x64x256xf32, #tpu.memory_space<vmem>>, %arg2: memref<4x64xf32, #tpu.memory_space<vmem>>, %arg3: memref<64x4xf32, #tpu.memory_space<vmem>>, %arg4: memref<2x64x256xf32, #tpu.memory_space<vmem>>) attributes {dimension_semantics = [#tpu.dimension_semantics<parallel>], iteration_bounds = array<i64: 1>, scalar_prefetch = 0 : i64, scratch_operands = 0 : i64, tpu.core_type = #tpu.core_type<tc>, window_params = [{transform_indices = @transform_0, window_bounds = array<i64: 2, 64, 256>}, {pipeline_mode = #tpu.pipeline_mode<synchronous>, transform_indices = @transform_1, window_bounds = array<i64: 4, 64>}, {pipeline_mode = #tpu.pipeline_mode<synchronous>, transform_indices = @transform_2, window_bounds = array<i64: 64, 4>}, {transform_indices = @transform_3, window_bounds = array<i64: 2, 64, 256>}]} {
    %c0 = arith.constant 0 : index
    %c0_0 = arith.constant 0 : index
    %c0_1 = arith.constant 0 : index
    %0 = vector.load %arg1[%c0, %c0_0, %c0_1] : memref<2x64x256xf32, #tpu.memory_space<vmem>>, vector<2x64x256xf32>
    %cst = arith.constant dense<0.000000e+00> : vector<2x64xf32>
    %1 = vector.multi_reduction <add>, %0, %cst [2] : vector<2x64x256xf32> to vector<2x64xf32>
    %cst_2 = arith.constant 3.906250e-03 : f32
    %2 = vector.broadcast %cst_2 : f32 to vector<2x64xf32>
    %3 = arith.mulf %1, %2 : vector<2x64xf32>
    %c0_3 = arith.constant 0 : index
    %c0_4 = arith.constant 0 : index
    %4 = vector.load %arg2[%c0_3, %c0_4] : memref<4x64xf32, #tpu.memory_space<vmem>>, vector<4x64xf32>
    %cst_5 = arith.constant dense<0.000000e+00> : vector<2x4xf32>
    %5 = tpu.matmul %3, %4, %cst_5 {dimension_numbers = #tpu.dot_dimension_numbers<[1], [1], [0], [0], [0, 0, 1, 0], [], []>} : vector<2x64xf32>, vector<4x64xf32>, vector<2x4xf32> -> vector<2x4xf32>
    %cst_6 = arith.constant 0.000000e+00 : f32
    %6 = vector.broadcast %cst_6 : f32 to vector<2x4xf32>
    %7 = arith.maximumf %5, %6 : vector<2x4xf32>
    %c0_7 = arith.constant 0 : index
    %c0_8 = arith.constant 0 : index
    %8 = vector.load %arg3[%c0_7, %c0_8] : memref<64x4xf32, #tpu.memory_space<vmem>>, vector<64x4xf32>
    %cst_9 = arith.constant dense<0.000000e+00> : vector<2x64xf32>
    %9 = tpu.matmul %7, %8, %cst_9 {dimension_numbers = #tpu.dot_dimension_numbers<[1], [1], [0], [0], [0, 0, 1, 0], [], []>} : vector<2x4xf32>, vector<64x4xf32>, vector<2x64xf32> -> vector<2x64xf32>
    %10 = arith.negf %9 : vector<2x64xf32>
    %11 = math.exp %10 : vector<2x64xf32>
    %cst_10 = arith.constant 1.000000e+00 : f32
    %12 = vector.broadcast %cst_10 : f32 to vector<2x64xf32>
    %13 = arith.addf %12, %11 : vector<2x64xf32>
    %14 = arith.divf %12, %13 : vector<2x64xf32>
    %c0_11 = arith.constant 0 : index
    %c0_12 = arith.constant 0 : index
    %c0_13 = arith.constant 0 : index
    %15 = vector.load %arg1[%c0_11, %c0_12, %c0_13] : memref<2x64x256xf32, #tpu.memory_space<vmem>>, vector<2x64x256xf32>
    %16 = vector.shape_cast %14 : vector<2x64xf32> to vector<2x64x1xf32>
    %17 = vector.broadcast %16 : vector<2x64x1xf32> to vector<2x64x256xf32>
    %18 = arith.mulf %15, %17 : vector<2x64x256xf32>
    %c0_14 = arith.constant 0 : index
    %c0_15 = arith.constant 0 : index
    %c0_16 = arith.constant 0 : index
    %19 = vector.load %arg4[%c0_14, %c0_15, %c0_16] : memref<2x64x256xf32, #tpu.memory_space<vmem>>, vector<2x64x256xf32>
    tpu.vector_store %arg4[%c0_14, %c0_15, %c0_16], %18 {strides = array<i32>} : memref<2x64x256xf32, #tpu.memory_space<vmem>>, vector<2x64x256xf32>,
    return
  }
  func.func @transform_0(%arg0: i32) -> (i32, i32, i32) {
    %c0_i32 = arith.constant 0 : i32
    %c0_i32_0 = arith.constant 0 : i32
    %c0_i32_1 = arith.constant 0 : i32
    return %arg0, %c0_i32, %c0_i32_0 : i32, i32, i32
  }
  func.func @transform_1(%arg0: i32) -> (i32, i32) {
    %c0_i32 = arith.constant 0 : i32
    %c0_i32_0 = arith.constant 0 : i32
    %c0_i32_1 = arith.constant 0 : i32
    return %c0_i32, %c0_i32_0 : i32, i32
  }
  func.func @transform_2(%arg0: i32) -> (i32, i32) {
    %c0_i32 = arith.constant 0 : i32
    %c0_i32_0 = arith.constant 0 : i32
    %c0_i32_1 = arith.constant 0 : i32
    return %c0_i32, %c0_i32_0 : i32, i32
  }
  func.func @transform_3(%arg0: i32) -> (i32, i32, i32) {
    %c0_i32 = arith.constant 0 : i32
    %c0_i32_0 = arith.constant 0 : i32
    %c0_i32_1 = arith.constant 0 : i32
    return %arg0, %c0_i32, %c0_i32_0 : i32, i32, i32
  }
}

</mosaic_0001>

<llo_original>
// kernel: tpu_custom_call.1
$region0: #{tpu_custom_call.1}
  #allocation0 [shape = 'u32[]', space=smem, size = 0x4, offset = 0x4, fixed_abs, tag = 'smem constant byte address 0x4 - core index']
  #allocation1 [shape = 'u32[144,128]{1,0:T(1,128)}', space=vmem, size = 0x12000, scoped, tag = 'internal scratch']
  %s0 = inlined_call_operand.hbm [shape: f32[2,64,256], index: 0, kind: input, shape index: {}]
  %s1 = inlined_call_operand.vmem [shape: f32[4,64], index: 1, kind: input, shape index: {}]
  %s2 = inlined_call_operand.vmem [shape: f32[64,4], index: 2, kind: input, shape index: {}]
  %s3 = inlined_call_operand.hbm [shape: f32[2,64,256], index: 3, kind: output, shape index: {}]
  %s4 = sld [smem:[#allocation0]]
  $region26: #{tpu_custom_call.1} parent=0
    _
  %s6 = ssub.s32 1, %s4
  %s7 = scalar_select 0, %s6, %s4
  $region1: #{tpu_custom_call.1} parent=0
    #allocation2 [shape = 'u8[131072]{0}', space=vmem, size = 0x20000, scoped, tag = 'input window, operand 0, single buffered']
    #allocation3 [shape = 's32[1]{0}', space=sflag, size = 0x4, scoped, tag = 'scoped memory for tpu_custom_call.1']
    #allocation4 [shape = 's32[1]{0}', space=sflag, size = 0x4, scoped, tag = 'scoped memory for tpu_custom_call.1']
    #allocation5 [shape = 'u8[131072]{0}', space=vmem, size = 0x20000, scoped, tag = 'output window, operand 0, single buffered']
    %8 = vsyncpa [#allocation3], 0
    %9 = vsyncpa [#allocation4], 0
    // Predicated region
    $region2: #{tpu_custom_call.1} parent=1 // pred_check
      _
    $region3: #{tpu_custom_call.1} parent=1 // pred_check_branch
      %11 = sbr.rel (0) target = $region5
    $region4: #{tpu_custom_call.1} parent=1 // pred_region
      %s13 = ssub.s32 4096, 4096
      %14 = vsyncadd [#allocation3], %s13
      %s15 = sshll.u32 [#allocation2], 4
      %s16 = int_to_ptr.vmem [resolvable:$true] %s15
      %21 = dma.hbm_to_vmem [thread:$0]  %s0, 4096, %s16, [#allocation3], 256, 256, 16
    $region5: #{tpu_custom_call.1} parent=1 // pred_fallthru
      _
    // Predicated region
    $region6: #{tpu_custom_call.1} parent=1 // pred_check
      _
    $region7: #{tpu_custom_call.1} parent=1 // pred_check_branch
      %23 = sbr.rel (0) target = $region9
    $region8: #{tpu_custom_call.1} parent=1 // pred_region
      _
    $region9: #{tpu_custom_call.1} parent=1 // pred_fallthru
      _
    // Predicated region
    $region10: #{tpu_custom_call.1} parent=1 // pred_check
      _
    $region11: #{tpu_custom_call.1} parent=1 // pred_check_branch
      %25 = sbr.rel (0) target = $region13
    $region12: #{tpu_custom_call.1} parent=1 // pred_region
      _
    $region13: #{tpu_custom_call.1} parent=1 // pred_fallthru
      _
    // Predicated region
    $region14: #{tpu_custom_call.1} parent=1 // pred_check
      _
    $region15: #{tpu_custom_call.1} parent=1 // pred_check_branch
      %27 = sbr.rel (0) target = $region17
    $region16: #{tpu_custom_call.1} parent=1 // pred_region
      %28 = dma.done [#allocation3], 4096
    $region17: #{tpu_custom_call.1} parent=1 // pred_fallthru
      _
    %v29 = vld [vmem:[#allocation2] sm:$0xff]
    %v30 = vld [vmem:[#allocation2 + $0x8] sm:$0xff]
    %v31 = vld [vmem:[#allocation2 + $0x10] sm:$0xff]
    %v32 = vld [vmem:[#allocation2 + $0x18] sm:$0xff]
    %v33 = vld [vmem:[#allocation2 + $0x20] sm:$0xff]
    %v34 = vld [vmem:[#allocation2 + $0x28] sm:$0xff]
    %v35 = vld [vmem:[#allocation2 + $0x30] sm:$0xff]
    %v36 = vld [vmem:[#allocation2 + $0x38] sm:$0xff]
    %v37 = vld [vmem:[#allocation2 + $0x40] sm:$0xff]
    %v38 = vld [vmem:[#allocation2 + $0x48] sm:$0xff]
    %v39 = vld [vmem:[#allocation2 + $0x50] sm:$0xff]
    %v40 = vld [vmem:[#allocation2 + $0x58] sm:$0xff]
    %v41 = vld [vmem:[#allocation2 + $0x60] sm:$0xff]
    %v42 = vld [vmem:[#allocation2 + $0x68] sm:$0xff]
    %v43 = vld [vmem:[#allocation2 + $0x70] sm:$0xff]
    %v44 = vld [vmem:[#allocation2 + $0x78] sm:$0xff]
    %v45 = vld [vmem:[#allocation2 + $0x80] sm:$0xff]
    %v46 = vld [vmem:[#allocation2 + $0x88] sm:$0xff]
    %v47 = vld [vmem:[#allocation2 + $0x90] sm:$0xff]
    %v48 = vld [vmem:[#allocation2 + $0x98] sm:$0xff]
    %v49 = vld [vmem:[#allocation2 + $0xa0] sm:$0xff]
    %v50 = vld [vmem:[#allocation2 + $0xa8] sm:$0xff]
    %v51 = vld [vmem:[#allocation2 + $0xb0] sm:$0xff]
    %v52 = vld [vmem:[#allocation2 + $0xb8] sm:$0xff]
    %v53 = vld [vmem:[#allocation2 + $0xc0] sm:$0xff]
    %v54 = vld [vmem:[#allocation2 + $0xc8] sm:$0xff]
    %v55 = vld [vmem:[#allocation2 + $0xd0] sm:$0xff]
    %v56 = vld [vmem:[#allocation2 + $0xd8] sm:$0xff]
    %v57 = vld [vmem:[#allocation2 + $0xe0] sm:$0xff]
    %v58 = vld [vmem:[#allocation2 + $0xe8] sm:$0xff]
    %v59 = vld [vmem:[#allocation2 + $0xf0] sm:$0xff]
    %v60 = vld [vmem:[#allocation2 + $0xf8] sm:$0xff]
    %v61 = vadd.f32 %v29, %v30
    %62 = vadd.xlane.f32.xlu0 %v61
    %v63 = vpop.xlane.xlu0 %62
    %v64 = vadd.f32 %v31, %v32
    %65 = vadd.xlane.f32.xlu0 %v64
    %v66 = vpop.xlane.xlu0 %65
    %v67 = vadd.f32 %v33, %v34
    %68 = vadd.xlane.f32.xlu0 %v67
    %v69 = vpop.xlane.xlu0 %68
    %v70 = vadd.f32 %v35, %v36
    %71 = vadd.xlane.f32.xlu0 %v70
    %v72 = vpop.xlane.xlu0 %71
    %v73 = vadd.f32 %v37, %v38
    %74 = vadd.xlane.f32.xlu0 %v73
    %v75 = vpop.xlane.xlu0 %74
    %v76 = vadd.f32 %v39, %v40
    %77 = vadd.xlane.f32.xlu0 %v76
    %v78 = vpop.xlane.xlu0 %77
    %v79 = vadd.f32 %v41, %v42
    %80 = vadd.xlane.f32.xlu0 %v79
    %v81 = vpop.xlane.xlu0 %80
    %v82 = vadd.f32 %v43, %v44
    %83 = vadd.xlane.f32.xlu0 %v82
    %v84 = vpop.xlane.xlu0 %83
    %v85 = vadd.f32 %v45, %v46
    %86 = vadd.xlane.f32.xlu0 %v85
    %v87 = vpop.xlane.xlu0 %86
    %v88 = vadd.f32 %v47, %v48
    %89 = vadd.xlane.f32.xlu0 %v88
    %v90 = vpop.xlane.xlu0 %89
    %v91 = vadd.f32 %v49, %v50
    %92 = vadd.xlane.f32.xlu0 %v91
    %v93 = vpop.xlane.xlu0 %92
    %v94 = vadd.f32 %v51, %v52
    %95 = vadd.xlane.f32.xlu0 %v94
    %v96 = vpop.xlane.xlu0 %95
    %v97 = vadd.f32 %v53, %v54
    %98 = vadd.xlane.f32.xlu0 %v97
    %v99 = vpop.xlane.xlu0 %98
    %v100 = vadd.f32 %v55, %v56
    %101 = vadd.xlane.f32.xlu0 %v100
    %v102 = vpop.xlane.xlu0 %101
    %v103 = vadd.f32 %v57, %v58
    %104 = vadd.xlane.f32.xlu0 %v103
    %v105 = vpop.xlane.xlu0 %104
    %v106 = vadd.f32 %v59, %v60
    %107 = vadd.xlane.f32.xlu0 %v106
    %v108 = vpop.xlane.xlu0 %107
    %v109 = vmul.f32 %v63, 0.00390625
    %v110 = vmul.f32 %v66, 0.00390625
    %v111 = vmul.f32 %v69, 0.00390625
    %v112 = vmul.f32 %v72, 0.00390625
    %v113 = vmul.f32 %v75, 0.00390625
    %v114 = vmul.f32 %v78, 0.00390625
    %v115 = vmul.f32 %v81, 0.00390625
    %v116 = vmul.f32 %v84, 0.00390625
    %v117 = vmul.f32 %v87, 0.00390625
    %v118 = vmul.f32 %v90, 0.00390625
    %v119 = vmul.f32 %v93, 0.00390625
    %v120 = vmul.f32 %v96, 0.00390625
    %v121 = vmul.f32 %v99, 0.00390625
    %v122 = vmul.f32 %v102, 0.00390625
    %v123 = vmul.f32 %v105, 0.00390625
    %v124 = vmul.f32 %v108, 0.00390625
    %v125 = vld [vmem:[%s1] sm:$0xf]
    %v142 = vlaneseq
    %v143 = vand.u32 %v142, 127
    %v144 = vlaneseq
    %v145 = vshrl.u32 %v144, 7
    %v146 = vsub.s32 %v143, %v145
    %v147 = vrot.slane %v109, %v146
    %v148 = vadd.s32 %v143, 4294967288
    %v149 = vlaneseq
    %v150 = vshrl.u32 %v149, 7
    %v151 = vsub.s32 %v148, %v150
    %v152 = vrot.slane %v110, %v151
    %vm153 = vcmask 130112
    %v154 = vsel %vm153, %v152, %v147
    %v155 = vadd.s32 %v143, 4294967280
    %v156 = vlaneseq
    %v157 = vshrl.u32 %v156, 7
    %v158 = vsub.s32 %v155, %v157
    %v159 = vrot.slane %v111, %v158
    %vm160 = vcmask 195712
    %v161 = vsel %vm160, %v159, %v154
    %v162 = vadd.s32 %v143, 4294967272
    %v163 = vlaneseq
    %v164 = vshrl.u32 %v163, 7
    %v165 = vsub.s32 %v162, %v164
    %v166 = vrot.slane %v112, %v165
    %vm167 = vcmask 261312
    %v168 = vsel %vm167, %v166, %v161
    %v169 = vadd.s32 %v143, 4294967264
    %v170 = vlaneseq
    %v171 = vshrl.u32 %v170, 7
    %v172 = vsub.s32 %v169, %v171
    %v173 = vrot.slane %v113, %v172
    %vm174 = vcmask 326912
    %v175 = vsel %vm174, %v173, %v168
    %v176 = vadd.s32 %v143, 4294967256
    %v177 = vlaneseq
    %v178 = vshrl.u32 %v177, 7
    %v179 = vsub.s32 %v176, %v178
    %v180 = vrot.slane %v114, %v179
    %vm181 = vcmask 392512
    %v182 = vsel %vm181, %v180, %v175
    %v183 = vadd.s32 %v143, 4294967248
    %v184 = vlaneseq
    %v185 = vshrl.u32 %v184, 7
    %v186 = vsub.s32 %v183, %v185
    %v187 = vrot.slane %v115, %v186
    %vm188 = vcmask 458112
    %v189 = vsel %vm188, %v187, %v182
    %v190 = vadd.s32 %v143, 4294967240
    %v191 = vlaneseq
    %v192 = vshrl.u32 %v191, 7
    %v193 = vsub.s32 %v190, %v192
    %v194 = vrot.slane %v116, %v193
    %vm195 = vcmask 523712
    %v196 = vsel %vm195, %v194, %v189
    %v197 = vlaneseq
    %v198 = vshrl.u32 %v197, 7
    %v199 = vsub.s32 %v143, %v198
    %v200 = vrot.slane %v117, %v199
    %v201 = vlaneseq
    %v202 = vshrl.u32 %v201, 7
    %v203 = vsub.s32 %v148, %v202
    %v204 = vrot.slane %v118, %v203
    %v205 = vsel %vm153, %v204, %v200
    %v206 = vlaneseq
    %v207 = vshrl.u32 %v206, 7
    %v208 = vsub.s32 %v155, %v207
    %v209 = vrot.slane %v119, %v208
    %v210 = vsel %vm160, %v209, %v205
    %v211 = vlaneseq
    %v212 = vshrl.u32 %v211, 7
    %v213 = vsub.s32 %v162, %v212
    %v214 = vrot.slane %v120, %v213
    %v215 = vsel %vm167, %v214, %v210
    %v216 = vlaneseq
    %v217 = vshrl.u32 %v216, 7
    %v218 = vsub.s32 %v169, %v217
    %v219 = vrot.slane %v121, %v218
    %v220 = vsel %vm174, %v219, %v215
    %v221 = vlaneseq
    %v222 = vshrl.u32 %v221, 7
    %v223 = vsub.s32 %v176, %v222
    %v224 = vrot.slane %v122, %v223
    %v225 = vsel %vm181, %v224, %v220
    %v226 = vlaneseq
    %v227 = vshrl.u32 %v226, 7
    %v228 = vsub.s32 %v183, %v227
    %v229 = vrot.slane %v123, %v228
    %v230 = vsel %vm188, %v229, %v225
    %v231 = vlaneseq
    %v232 = vshrl.u32 %v231, 7
    %v233 = vsub.s32 %v190, %v232
    %v234 = vrot.slane %v124, %v233
    %v235 = vsel %vm195, %v234, %v230
    %vm236 = vcmask 1041409
    %v237 = vsel %vm236, %v235, %v196
    %vm238 = vcmask 523264
    %v239 = vsel %vm238, %v237, 0
    %v242 = vsel %vm238, %v125, 0
    %244 = vmatprep.subr.mxu0 0.0
    %245 = vmatpush1.xpose.msra.mxu0 0.0
    %246 = vmatprep.subr.mxu0 0.0
    %247 = vmatpush1.xpose.msra.mxu0 0.0
    %248 = vmatprep.subr.mxu0 0.0
    %249 = vmatpush1.xpose.msra.mxu0 0.0
    %250 = vmatprep.subr.mxu0 0.0
    %251 = vmatpush1.xpose.msra.mxu0 0.0
    %252 = vmatprep.subr.mxu0 0.0
    %253 = vmatpush1.xpose.msra.mxu0 0.0
    %254 = vmatprep.subr.mxu0 0.0
    %255 = vmatpush1.xpose.msra.mxu0 0.0
    %256 = vmatprep.subr.mxu0 0.0
    %257 = vmatpush1.xpose.msra.mxu0 0.0
    %258 = vmatprep.subr.mxu0 0.0
    %259 = vmatpush1.xpose.msra.mxu0 0.0
    %260 = vmatprep.subr.mxu0 0.0
    %261 = vmatpush1.xpose.msra.mxu0 0.0
    %262 = vmatprep.subr.mxu0 0.0
    %263 = vmatpush1.xpose.msra.mxu0 0.0
    %264 = vmatprep.subr.mxu0 0.0
    %265 = vmatpush1.xpose.msra.mxu0 0.0
    %266 = vmatprep.subr.mxu0 0.0
    %267 = vmatpush1.xpose.msra.mxu0 0.0
    %268 = vmatprep.subr.mxu0 0.0
    %269 = vmatpush1.xpose.msra.mxu0 0.0
    %270 = vmatprep.subr.mxu0 0.0
    %271 = vmatpush1.xpose.msra.mxu0 0.0
    %272 = vmatprep.subr.mxu0 0.0
    %273 = vmatpush1.xpose.msra.mxu0 0.0
    %274 = vmatprep.subr.mxu0 0.0
    %275 = vmatpush1.xpose.msra.mxu0 %v242
    %276 = vmatprep.subr.mxu0 0.0
    %277 = vmatpush2.xpose.msra.mxu0 0.0
    %278 = vmatprep.subr.mxu0 0.0
    %279 = vmatpush2.xpose.msra.mxu0 0.0
    %280 = vmatprep.subr.mxu0 0.0
    %281 = vmatpush2.xpose.msra.mxu0 0.0
    %282 = vmatprep.subr.mxu0 0.0
    %283 = vmatpush2.xpose.msra.mxu0 0.0
    %284 = vmatprep.subr.mxu0 0.0
    %285 = vmatpush2.xpose.msra.mxu0 0.0
    %286 = vmatprep.subr.mxu0 0.0
    %287 = vmatpush2.xpose.msra.mxu0 0.0
    %288 = vmatprep.subr.mxu0 0.0
    %289 = vmatpush2.xpose.msra.mxu0 0.0
    %290 = vmatprep.subr.mxu0 0.0
    %291 = vmatpush2.xpose.msra.mxu0 0.0
    %292 = vmatprep.subr.mxu0 0.0
    %293 = vmatpush2.xpose.msra.mxu0 0.0
    %294 = vmatprep.subr.mxu0 0.0
    %295 = vmatpush2.xpose.msra.mxu0 0.0
    %296 = vmatprep.subr.mxu0 0.0
    %297 = vmatpush2.xpose.msra.mxu0 0.0
    %298 = vmatprep.subr.mxu0 0.0
    %299 = vmatpush2.xpose.msra.mxu0 0.0
    %300 = vmatprep.subr.mxu0 0.0
    %301 = vmatpush2.xpose.msra.mxu0 0.0
    %302 = vmatprep.subr.mxu0 0.0
    %303 = vmatpush2.xpose.msra.mxu0 0.0
    %304 = vmatprep.subr.mxu0 0.0
    %305 = vmatpush2.xpose.msra.mxu0 0.0
    %306 = vmatprep.subr.mxu0 0.0
    %307 = vmatpush2.xpose.msra.mxu0 0.0
    %308 = vmatprep.mubr.f32.mxu0 0.0
    %309 = vmatmul.mubr.f32.gmra.mxu0 %v239
    %v310 = vpop.f32.mrf.mxu0
    %v311 = vadd.f32 0.0, %v310
    %v312 = vpop.f32.mrf.mxu0
    %313 = vdwg.mxu0
    %v314 = vmax.f32 %v311, 0.0
    %v315 = vld [vmem:[%s2] sm:$0xff]
    %v316 = vld [vmem:[%s2 + $0x8] sm:$0xff]
    %v317 = vld [vmem:[%s2 + $0x10] sm:$0xff]
    %v318 = vld [vmem:[%s2 + $0x18] sm:$0xff]
    %v319 = vld [vmem:[%s2 + $0x20] sm:$0xff]
    %v320 = vld [vmem:[%s2 + $0x28] sm:$0xff]
    %v321 = vld [vmem:[%s2 + $0x30] sm:$0xff]
    %v322 = vld [vmem:[%s2 + $0x38] sm:$0xff]
    %vm323 = vcmask 31744
    %v325 = vsel %vm323, %v314, 0
    %v328 = vsel %vm323, %v315, 0
    %v331 = vsel %vm323, %v316, 0
    %v334 = vsel %vm323, %v317, 0
    %v337 = vsel %vm323, %v318, 0
    %v340 = vsel %vm323, %v319, 0
    %v343 = vsel %vm323, %v320, 0
    %v346 = vsel %vm323, %v321, 0
    %v349 = vsel %vm323, %v322, 0
    %351 = vmatprep.subr.mxu0 0.0
    %352 = vmatpush1.xpose.msra.mxu0 0.0
    %353 = vmatprep.subr.mxu0 0.0
    %354 = vmatpush1.xpose.msra.mxu0 0.0
    %355 = vmatprep.subr.mxu0 0.0
    %356 = vmatpush1.xpose.msra.mxu0 0.0
    %357 = vmatprep.subr.mxu0 0.0
    %358 = vmatpush1.xpose.msra.mxu0 0.0
    %359 = vmatprep.subr.mxu0 0.0
    %360 = vmatpush1.xpose.msra.mxu0 0.0
    %361 = vmatprep.subr.mxu0 0.0
    %362 = vmatpush1.xpose.msra.mxu0 0.0
    %363 = vmatprep.subr.mxu0 0.0
    %364 = vmatpush1.xpose.msra.mxu0 0.0
    %365 = vmatprep.subr.mxu0 0.0
    %366 = vmatpush1.xpose.msra.mxu0 0.0
    %367 = vmatprep.subr.mxu0 0.0
    %368 = vmatpush1.xpose.msra.mxu0 %v349
    %369 = vmatprep.subr.mxu0 0.0
    %370 = vmatpush1.xpose.msra.mxu0 %v346
    %371 = vmatprep.subr.mxu0 0.0
    %372 = vmatpush1.xpose.msra.mxu0 %v343
    %373 = vmatprep.subr.mxu0 0.0
    %374 = vmatpush1.xpose.msra.mxu0 %v340
    %375 = vmatprep.subr.mxu0 0.0
    %376 = vmatpush1.xpose.msra.mxu0 %v337
    %377 = vmatprep.subr.mxu0 0.0
    %378 = vmatpush1.xpose.msra.mxu0 %v334
    %379 = vmatprep.subr.mxu0 0.0
    %380 = vmatpush1.xpose.msra.mxu0 %v331
    %381 = vmatprep.subr.mxu0 0.0
    %382 = vmatpush1.xpose.msra.mxu0 %v328
    %383 = vmatprep.subr.mxu0 0.0
    %384 = vmatpush2.xpose.msra.mxu0 0.0
    %385 = vmatprep.subr.mxu0 0.0
    %386 = vmatpush2.xpose.msra.mxu0 0.0
    %387 = vmatprep.subr.mxu0 0.0
    %388 = vmatpush2.xpose.msra.mxu0 0.0
    %389 = vmatprep.subr.mxu0 0.0
    %390 = vmatpush2.xpose.msra.mxu0 0.0
    %391 = vmatprep.subr.mxu0 0.0
    %392 = vmatpush2.xpose.msra.mxu0 0.0
    %393 = vmatprep.subr.mxu0 0.0
    %394 = vmatpush2.xpose.msra.mxu0 0.0
    %395 = vmatprep.subr.mxu0 0.0
    %396 = vmatpush2.xpose.msra.mxu0 0.0
    %397 = vmatprep.subr.mxu0 0.0
    %398 = vmatpush2.xpose.msra.mxu0 0.0
    %399 = vmatprep.subr.mxu0 0.0
    %400 = vmatpush2.xpose.msra.mxu0 0.0
    %401 = vmatprep.subr.mxu0 0.0
    %402 = vmatpush2.xpose.msra.mxu0 0.0
    %403 = vmatprep.subr.mxu0 0.0
    %404 = vmatpush2.xpose.msra.mxu0 0.0
    %405 = vmatprep.subr.mxu0 0.0
    %406 = vmatpush2.xpose.msra.mxu0 0.0
    %407 = vmatprep.subr.mxu0 0.0
    %408 = vmatpush2.xpose.msra.mxu0 0.0
    %409 = vmatprep.subr.mxu0 0.0
    %410 = vmatpush2.xpose.msra.mxu0 0.0
    %411 = vmatprep.subr.mxu0 0.0
    %412 = vmatpush2.xpose.msra.mxu0 0.0
    %413 = vmatprep.subr.mxu0 0.0
    %414 = vmatpush2.xpose.msra.mxu0 0.0
    %415 = vmatprep.mubr.f32.mxu0 0.0
    %416 = vmatmul.mubr.f32.gmra.mxu0 %v325
    %v417 = vpop.f32.mrf.mxu0
    %v418 = vadd.f32 0.0, %v417
    %v419 = vpop.f32.mrf.mxu0
    %420 = vdwg.mxu0
    %v421 = vxor.u32 %v418, 2147483648
    %v422 = vmul.f32 %v421, 1.442695
    %v423 = vpow.pop %v422
    %v424 = vadd.f32 %v423, 1.0
    %v425 = vrcp.pop %v424
    %v426 = vmul.f32 1.0, %v425
    %v427 = vlaneseq
    %v428 = vshrl.u32 %v427, 7
    %v429 = vsub.s32 0, %v428
    %v430 = vrot.slane %v426, %v429
    %432 = vbcast.lane.b32.xlu0 %v430, 256
    %v433 = vpop.permute.xlu0 %432
    %s435 = sor.u32 256, 8
    %436 = vbcast.lane.b32.xlu0 %v430, %s435
    %v437 = vpop.permute.xlu0 %436
    %s439 = sor.u32 256, 16
    %440 = vbcast.lane.b32.xlu0 %v430, %s439
    %v441 = vpop.permute.xlu0 %440
    %s443 = sor.u32 256, 24
    %444 = vbcast.lane.b32.xlu0 %v430, %s443
    %v445 = vpop.permute.xlu0 %444
    %s447 = sor.u32 256, 32
    %448 = vbcast.lane.b32.xlu0 %v430, %s447
    %v449 = vpop.permute.xlu0 %448
    %s451 = sor.u32 256, 40
    %452 = vbcast.lane.b32.xlu0 %v430, %s451
    %v453 = vpop.permute.xlu0 %452
    %s455 = sor.u32 256, 48
    %456 = vbcast.lane.b32.xlu0 %v430, %s455
    %v457 = vpop.permute.xlu0 %456
    %s459 = sor.u32 256, 56
    %460 = vbcast.lane.b32.xlu0 %v430, %s459
    %v461 = vpop.permute.xlu0 %460
    %v462 = vlaneseq
    %v463 = vshrl.u32 %v462, 7
    %v464 = vsub.s32 1, %v463
    %v465 = vrot.slane %v426, %v464
    %467 = vbcast.lane.b32.xlu0 %v465, 256
    %v468 = vpop.permute.xlu0 %467
    %s470 = sor.u32 256, 8
    %471 = vbcast.lane.b32.xlu0 %v465, %s470
    %v472 = vpop.permute.xlu0 %471
    %s474 = sor.u32 256, 16
    %475 = vbcast.lane.b32.xlu0 %v465, %s474
    %v476 = vpop.permute.xlu0 %475
    %s478 = sor.u32 256, 24
    %479 = vbcast.lane.b32.xlu0 %v465, %s478
    %v480 = vpop.permute.xlu0 %479
    %s482 = sor.u32 256, 32
    %483 = vbcast.lane.b32.xlu0 %v465, %s482
    %v484 = vpop.permute.xlu0 %483
    %s486 = sor.u32 256, 40
    %487 = vbcast.lane.b32.xlu0 %v465, %s486
    %v488 = vpop.permute.xlu0 %487
    %s490 = sor.u32 256, 48
    %491 = vbcast.lane.b32.xlu0 %v465, %s490
    %v492 = vpop.permute.xlu0 %491
    %s494 = sor.u32 256, 56
    %495 = vbcast.lane.b32.xlu0 %v465, %s494
    %v496 = vpop.permute.xlu0 %495
    %v497 = vmul.f32 %v29, %v433
    %v498 = vmul.f32 %v30, %v433
    %v499 = vmul.f32 %v31, %v437
    %v500 = vmul.f32 %v32, %v437
    %v501 = vmul.f32 %v33, %v441
    %v502 = vmul.f32 %v34, %v441
    %v503 = vmul.f32 %v35, %v445
    %v504 = vmul.f32 %v36, %v445
    %v505 = vmul.f32 %v37, %v449
    %v506 = vmul.f32 %v38, %v449
    %v507 = vmul.f32 %v39, %v453
    %v508 = vmul.f32 %v40, %v453
    %v509 = vmul.f32 %v41, %v457
    %v510 = vmul.f32 %v42, %v457
    %v511 = vmul.f32 %v43, %v461
    %v512 = vmul.f32 %v44, %v461
    %v513 = vmul.f32 %v45, %v468
    %v514 = vmul.f32 %v46, %v468
    %v515 = vmul.f32 %v47, %v472
    %v516 = vmul.f32 %v48, %v472
    %v517 = vmul.f32 %v49, %v476
    %v518 = vmul.f32 %v50, %v476
    %v519 = vmul.f32 %v51, %v480
    %v520 = vmul.f32 %v52, %v480
    %v521 = vmul.f32 %v53, %v484
    %v522 = vmul.f32 %v54, %v484
    %v523 = vmul.f32 %v55, %v488
    %v524 = vmul.f32 %v56, %v488
    %v525 = vmul.f32 %v57, %v492
    %v526 = vmul.f32 %v58, %v492
    %v527 = vmul.f32 %v59, %v496
    %v528 = vmul.f32 %v60, %v496
    %529 = vst [vmem:[#allocation5] sm:$0xff] %v497
    %530 = vst [vmem:[#allocation5 + $0x8] sm:$0xff] %v498
    %531 = vst [vmem:[#allocation5 + $0x10] sm:$0xff] %v499
    %532 = vst [vmem:[#allocation5 + $0x18] sm:$0xff] %v500
    %533 = vst [vmem:[#allocation5 + $0x20] sm:$0xff] %v501
    %534 = vst [vmem:[#allocation5 + $0x28] sm:$0xff] %v502
    %535 = vst [vmem:[#allocation5 + $0x30] sm:$0xff] %v503
    %536 = vst [vmem:[#allocation5 + $0x38] sm:$0xff] %v504
    %537 = vst [vmem:[#allocation5 + $0x40] sm:$0xff] %v505
    %538 = vst [vmem:[#allocation5 + $0x48] sm:$0xff] %v506
    %539 = vst [vmem:[#allocation5 + $0x50] sm:$0xff] %v507
    %540 = vst [vmem:[#allocation5 + $0x58] sm:$0xff] %v508
    %541 = vst [vmem:[#allocation5 + $0x60] sm:$0xff] %v509
    %542 = vst [vmem:[#allocation5 + $0x68] sm:$0xff] %v510
    %543 = vst [vmem:[#allocation5 + $0x70] sm:$0xff] %v511
    %544 = vst [vmem:[#allocation5 + $0x78] sm:$0xff] %v512
    %545 = vst [vmem:[#allocation5 + $0x80] sm:$0xff] %v513
    %546 = vst [vmem:[#allocation5 + $0x88] sm:$0xff] %v514
    %547 = vst [vmem:[#allocation5 + $0x90] sm:$0xff] %v515
    %548 = vst [vmem:[#allocation5 + $0x98] sm:$0xff] %v516
    %549 = vst [vmem:[#allocation5 + $0xa0] sm:$0xff] %v517
    %550 = vst [vmem:[#allocation5 + $0xa8] sm:$0xff] %v518
    %551 = vst [vmem:[#allocation5 + $0xb0] sm:$0xff] %v519
    %552 = vst [vmem:[#allocation5 + $0xb8] sm:$0xff] %v520
    %553 = vst [vmem:[#allocation5 + $0xc0] sm:$0xff] %v521
    %554 = vst [vmem:[#allocation5 + $0xc8] sm:$0xff] %v522
    %555 = vst [vmem:[#allocation5 + $0xd0] sm:$0xff] %v523
    %556 = vst [vmem:[#allocation5 + $0xd8] sm:$0xff] %v524
    %557 = vst [vmem:[#allocation5 + $0xe0] sm:$0xff] %v525
    %558 = vst [vmem:[#allocation5 + $0xe8] sm:$0xff] %v526
    %559 = vst [vmem:[#allocation5 + $0xf0] sm:$0xff] %v527
    %560 = vst [vmem:[#allocation5 + $0xf8] sm:$0xff] %v528
    // Predicated region
    $region18: #{tpu_custom_call.1} parent=1 // pred_check
      _
    $region19: #{tpu_custom_call.1} parent=1 // pred_check_branch
      %562 = sbr.rel (0) target = $region21
    $region20: #{tpu_custom_call.1} parent=1 // pred_region
      %s564 = ssub.s32 4096, 4096
      %565 = vsyncadd [#allocation4], %s564
      %s566 = sshll.u32 [#allocation5], 4
      %s567 = int_to_ptr.vmem [resolvable:$true] %s566
      %572 = dma.vmem_to_hbm [thread:$0]  %s567, 4096, %s3, [#allocation4], 256, 256, 16
    $region21: #{tpu_custom_call.1} parent=1 // pred_fallthru
      _
    // Predicated region
    $region22: #{tpu_custom_call.1} parent=1 // pred_check
      _
    $region23: #{tpu_custom_call.1} parent=1 // pred_check_branch
      %574 = sbr.rel (0) target = $region25
    $region24: #{tpu_custom_call.1} parent=1 // pred_region
      %575 = dma.done [#allocation4], 4096
    $region25: #{tpu_custom_call.1} parent=1 // pred_fallthru
      _
    %576 = vsyncpa [#allocation3], 1
    %577 = vsyncpa [#allocation4], 1

</llo_original>
